<compile_context>
chip_gen: v7x
topology: tpu7x:2x2x1
jax: 0.10.0
libtpu: 0.0.40
codegen_flags: <defaults>
</compile_context>

<pallas_src>
import jax
import jax.numpy as jnp
from jax.experimental import pallas as pl
from jax.experimental.pallas import tpu as pltpu


# --------------------------------------------------------------------------------------------
# helpers
# --------------------------------------------------------------------------------------------
def _layernorm(y, gamma, beta, eps=1e-5):
    mu = jnp.mean(y, axis=-1, keepdims=True)
    var = jnp.mean((y - mu) ** 2, axis=-1, keepdims=True)
    return (y - mu) * jax.lax.rsqrt(var + eps) * gamma + beta


def _vmem_limit_bytes():
    # Generation-aware scoped-VMEM limit: ~75% of physical (v5e/v6e 128MiB -> 96MiB,
    # v7x 64MiB -> 48MiB).  Falls back to a conservative 48MiB.
    try:
        cap = pltpu.get_tpu_info().vmem_capacity_bytes
        return int(cap * 0.75)
    except Exception:
        return 48 * 1024 * 1024


def _const2(arr):
    # Constant (grid-invariant) 2-D operand for a rank-2 grid.
    return pl.BlockSpec(arr.shape, lambda b, si: (0, 0))


# --------------------------------------------------------------------------------------------
# Pass 1: fused QKV projection (scale folded into Wq / bq at prep time)
# --------------------------------------------------------------------------------------------
def _qkv_proj_kernel(x_ref, w_ref, b_ref, qkv_ref):
    # x_ref: (1, ts, D) bf16 ; w_ref: (D, 3D) bf16 ; b_ref: (1, 3D) f32 ; qkv_ref: (1, ts, 3D) bf16
    qkv = jnp.dot(x_ref[0], w_ref[...], preferred_element_type=jnp.float32) + b_ref[...]
    qkv_ref[0] = qkv.astype(qkv_ref.dtype)


# --------------------------------------------------------------------------------------------
# Pass 2: flash attention over pre-projected (scaled) Q / K / V
# --------------------------------------------------------------------------------------------
def _flash_attn_kernel(q_ref, k_ref, v_ref, o_ref, m_sc, l_sc, acc_sc):
    ki = pl.program_id(2)
    nk = pl.num_programs(2)

    @pl.when(ki == 0)
    def _init():
        m_sc[...] = jnp.full(m_sc.shape, -jnp.inf, jnp.float32)
        l_sc[...] = jnp.zeros(l_sc.shape, jnp.float32)
        acc_sc[...] = jnp.zeros(acc_sc.shape, jnp.float32)

    q = q_ref[0]                                      # (H, tq, hd) bf16, pre-scaled by 1/sqrt(hd)
    k = k_ref[0]                                      # (H, tk, hd) bf16
    v = v_ref[0]                                      # (H, tk, hd) bf16

    s = jnp.einsum("hqd,hkd->hqk", q, k, preferred_element_type=jnp.float32)   # (H, tq, tk)
    m_prev = m_sc[...]
    m_new = jnp.maximum(m_prev, jnp.max(s, axis=-1, keepdims=True))
    alpha = jnp.exp(m_prev - m_new)
    p = jnp.exp(s - m_new)
    l_sc[...] = alpha * l_sc[...] + jnp.sum(p, axis=-1, keepdims=True)
    acc_sc[...] = alpha * acc_sc[...] + jnp.einsum(
        "hqk,hkd->hqd", p.astype(v.dtype), v, preferred_element_type=jnp.float32)
    m_sc[...] = m_new

    @pl.when(ki == nk - 1)
    def _finalize():
        # exact normalization (runs once per q-tile; review correctness note)
        o_ref[0] = (acc_sc[...] / l_sc[...]).astype(o_ref.dtype)


# --------------------------------------------------------------------------------------------
# Pass 3: out-projection + residual/LN1 + FFN + residual/LN2
# --------------------------------------------------------------------------------------------
def _out_ffn_kernel(x_ref, attn_ref, wo_ref, bo_ref, g1_ref, be1_ref,
                    w1_ref, b1_ref, w2_ref, b2_ref, g2_ref, be2_ref, o_ref):
    # Head-sum is already folded into a single full-width matmul: attn_ref is (1, ts, D) with
    # heads concatenated along lanes, wo_ref is (D, D).
    attn_out = jnp.dot(attn_ref[0], wo_ref[...],
                       preferred_element_type=jnp.float32) + bo_ref[...]          # (ts, D)

    x_f = x_ref[0].astype(jnp.float32)
    y = _layernorm(x_f + attn_out, g1_ref[...], be1_ref[...])                      # (ts, D)

    h1 = jnp.dot(y.astype(jnp.bfloat16), w1_ref[...],
                 preferred_element_type=jnp.float32) + b1_ref[...]                 # (ts, 4D)
    h1 = jnp.maximum(h1, 0.0)
    ff = jnp.dot(h1.astype(jnp.bfloat16), w2_ref[...],
                 preferred_element_type=jnp.float32) + b2_ref[...]                 # (ts, D)

    o_ref[0] = _layernorm(y + ff, g2_ref[...], be2_ref[...]).astype(o_ref.dtype)


# --------------------------------------------------------------------------------------------
# wrapper
# --------------------------------------------------------------------------------------------
def transformer_block(x, prep, *, heads, seq_tile=256, q_tile=256, kv_tile=256):
    """x: (B, S, D) float32.  prep: kernel-ready params from prepare_params()."""
    B, S, D = x.shape
    assert D % heads == 0
    hd = D // heads
    ts = min(seq_tile, S)
    tq = min(q_tile, S)
    tk = min(kv_tile, S)
    assert S % ts == 0 and S % tq == 0 and S % tk == 0, "S must divide evenly by the tiles"

    vmem = _vmem_limit_bytes()
    x_bf16 = x.astype(jnp.bfloat16)                 # MXU-path input; residual stays f32 below

    # ---- Pass 1: QKV projection (once per token) --------------------------------------------
    qkv = pl.pallas_call(
        _qkv_proj_kernel,
        out_shape=jax.ShapeDtypeStruct((B, S, 3 * D), jnp.bfloat16),
        grid=(B, S // ts),
        in_specs=[
            pl.BlockSpec((1, ts, D), lambda b, si: (b, si, 0)),
            _const2(prep["w_qkv"]),
            _const2(prep["b_qkv"]),
        ],
        out_specs=pl.BlockSpec((1, ts, 3 * D), lambda b, si: (b, si, 0)),
        compiler_params=pltpu.CompilerParams(
            dimension_semantics=("parallel", "parallel"),
            vmem_limit_bytes=vmem),
    )(x_bf16, prep["w_qkv"], prep["b_qkv"])

    # Head split in XLA (done once; keeps the kernels free of cross-lane reshapes/transposes).
    def split_heads(t):
        return t.reshape(B, S, heads, hd).transpose(0, 2, 1, 3)

    q = split_heads(qkv[..., :D])
    k = split_heads(qkv[..., D:2 * D])
    v = split_heads(qkv[..., 2 * D:])

    # ---- Pass 2: flash attention (no weights resident) --------------------------------------
    attn = pl.pallas_call(
        _flash_attn_kernel,
        out_shape=jax.ShapeDtypeStruct((B, heads, S, hd), jnp.bfloat16),
        grid_spec=pltpu.PrefetchScalarGridSpec(
            num_scalar_prefetch=0,
            grid=(B, S // tq, S // tk),
            in_specs=[
                pl.BlockSpec((1, heads, tq, hd), lambda b, qi, ki: (b, 0, qi, 0)),
                pl.BlockSpec((1, heads, tk, hd), lambda b, qi, ki: (b, 0, ki, 0)),
                pl.BlockSpec((1, heads, tk, hd), lambda b, qi, ki: (b, 0, ki, 0)),
            ],
            out_specs=pl.BlockSpec((1, heads, tq, hd), lambda b, qi, ki: (b, 0, qi, 0)),
            scratch_shapes=[
                pltpu.VMEM((heads, tq, 1), jnp.float32),    # m (running max)
                pltpu.VMEM((heads, tq, 1), jnp.float32),    # l (running denom)
                pltpu.VMEM((heads, tq, hd), jnp.float32),   # acc (running numerator)
            ],
        ),
        compiler_params=pltpu.CompilerParams(
            dimension_semantics=("parallel", "parallel", "arbitrary"),
            vmem_limit_bytes=vmem),
    )(q, k, v)

    # Merge heads back to (B, S, D) so the out-projection is one full-width matmul.
    attn_m = attn.transpose(0, 2, 1, 3).reshape(B, S, D)

    # ---- Pass 3: out-proj + LN1 + FFN + LN2 (separate call: FFN weights not resident during
    #              the attention reduction) ----------------------------------------------------
    weights = (prep["wo"], prep["bo"], prep["ln1_g"], prep["ln1_b"],
               prep["w1"], prep["b1"], prep["w2"], prep["b2"],
               prep["ln2_g"], prep["ln2_b"])

    out = pl.pallas_call(
        _out_ffn_kernel,
        out_shape=jax.ShapeDtypeStruct((B, S, D), x.dtype),
        grid=(B, S // ts),
        in_specs=[
            pl.BlockSpec((1, ts, D), lambda b, si: (b, si, 0)),   # x (f32 residual)
            pl.BlockSpec((1, ts, D), lambda b, si: (b, si, 0)),   # merged attention (bf16)
        ] + [_const2(w) for w in weights],
        out_specs=pl.BlockSpec((1, ts, D), lambda b, si: (b, si, 0)),
        compiler_params=pltpu.CompilerParams(
            dimension_semantics=("parallel", "parallel"),
            vmem_limit_bytes=vmem),
    )(x, attn_m, *weights)

    return out


# --------------------------------------------------------------------------------------------
# parameter preparation (PyTorch layout -> kernel-ready, done once)
# --------------------------------------------------------------------------------------------
def prepare_params(pt, heads):
    in_w = pt["in_proj_weight"]              # (3D, D) rows = [Wq; Wk; Wv]
    in_b = pt["in_proj_bias"]                # (3D,)
    D = in_w.shape[1]
    hd = D // heads
    scale = 1.0 / (hd ** 0.5)
    wdt = jnp.bfloat16

    # x @ in_w.T == x @ w_qkv ; fold the attention scale into the Q columns / Q bias.
    col_scale = jnp.concatenate(
        [jnp.full((D,), scale, jnp.float32), jnp.ones((2 * D,), jnp.float32)])
    w_qkv = (in_w.T * col_scale[None, :]).astype(wdt)          # (D, 3D)
    b_qkv = (in_b * col_scale).reshape(1, 3 * D).astype(jnp.float32)

    return dict(
        w_qkv=w_qkv,
        b_qkv=b_qkv,
        wo=pt["out_proj_weight"].T.astype(wdt),                 # (D, D): attn_flat @ wo
        bo=pt["out_proj_bias"].reshape(1, D).astype(jnp.float32),
        ln1_g=pt["ln1_weight"].reshape(1, D).astype(jnp.float32),
        ln1_b=pt["ln1_bias"].reshape(1, D).astype(jnp.float32),
        w1=pt["lin1_weight"].T.astype(wdt),                     # (D, 4D)
        b1=pt["lin1_bias"].reshape(1, -1).astype(jnp.float32),
        w2=pt["lin2_weight"].T.astype(wdt),                     # (4D, D)
        b2=pt["lin2_bias"].reshape(1, -1).astype(jnp.float32),
        ln2_g=pt["ln2_weight"].reshape(1, D).astype(jnp.float32),
        ln2_b=pt["ln2_bias"].reshape(1, D).astype(jnp.float32),
    )


def init_pt_params(key, dim):
    """Deterministic PyTorch-layout parameters (nn.MultiheadAttention / LayerNorm / Linear)."""
    keys = jax.random.split(key, 8)
    s = 0.05
    d4 = dim * 4
    return dict(
        in_proj_weight=jax.random.normal(keys[0], (3 * dim, dim), jnp.float32) * s,
        in_proj_bias=jax.random.normal(keys[1], (3 * dim,), jnp.float32) * s,
        out_proj_weight=jax.random.normal(keys[2], (dim, dim), jnp.float32) * s,
        out_proj_bias=jax.random.normal(keys[3], (dim,), jnp.float32) * s,
        ln1_weight=jnp.ones((dim,), jnp.float32),
        ln1_bias=jnp.zeros((dim,), jnp.float32),
        lin1_weight=jax.random.normal(keys[4], (d4, dim), jnp.float32) * s,
        lin1_bias=jax.random.normal(keys[5], (d4,), jnp.float32) * s,
        lin2_weight=jax.random.normal(keys[6], (dim, d4), jnp.float32) * s,
        lin2_bias=jax.random.normal(keys[7], (dim,), jnp.float32) * s,
        ln2_weight=jnp.ones((dim,), jnp.float32),
        ln2_bias=jnp.zeros((dim,), jnp.float32),
    )


# --------------------------------------------------------------------------------------------
# pure-JAX reference (matches the PyTorch forward, inference / no dropout)
# --------------------------------------------------------------------------------------------
def _reference_block(x, pt, heads):
    B, S, D = x.shape
    hd = D // heads
    qkv = x @ pt["in_proj_weight"].T + pt["in_proj_bias"]
    q, k, v = qkv[..., :D], qkv[..., D:2 * D], qkv[..., 2 * D:]

    def hsplit(t):
        return t.reshape(B, S, heads, hd).transpose(0, 2, 1, 3)

    q, k, v = hsplit(q), hsplit(k), hsplit(v)
    s = jnp.einsum("bhqd,bhkd->bhqk", q, k) / (hd ** 0.5)
    p = jax.nn.softmax(s, axis=-1)
    a = jnp.einsum("bhqk,bhkd->bhqd", p, v).transpose(0, 2, 1, 3).reshape(B, S, D)
    attn_out = a @ pt["out_proj_weight"].T + pt["out_proj_bias"]

    def ln(y, g, b):
        mu = y.mean(-1, keepdims=True)
        var = ((y - mu) ** 2).mean(-1, keepdims=True)
        return (y - mu) * jax.lax.rsqrt(var + 1e-5) * g + b

    y = ln(x + attn_out, pt["ln1_weight"], pt["ln1_bias"])
    h = jnp.maximum(y @ pt["lin1_weight"].T + pt["lin1_bias"], 0.0)
    ff = h @ pt["lin2_weight"].T + pt["lin2_bias"]
    return ln(y + ff, pt["ln2_weight"], pt["ln2_bias"])


if __name__ == "__main__":
    B, S, D, H = 2, 8, 32, 4   # batch, seq, dim, heads (dim % heads == 0)
    key = jax.random.PRNGKey(0)
    kx, kp = jax.random.split(key)
    x = jax.random.normal(kx, (B, S, D), jnp.float32)

    pt_params = init_pt_params(kp, D)
    prep = prepare_params(pt_params, H)

    out = transformer_block(x, prep, heads=H)
    out = jax.block_until_ready(out)
    assert out.shape == (B, S, D) and out.dtype == jnp.float32
    assert bool(jnp.all(jnp.isfinite(out)))

    ref = _reference_block(x, pt_params, H)
    err = float(jnp.max(jnp.abs(out - ref)))
    assert err < 0.1, f"max abs error vs reference too large: {err}"
    print("KERNEL_OK")
</pallas_src>

<mosaic_0001>
module attributes {stable_mosaic.version = 11 : i64} {
  func.func @_qkv_proj_kernel(%arg0: i32, %arg1: i32, %arg2: memref<1x8x32xbf16, #tpu.memory_space<vmem>>, %arg3: memref<32x96xbf16, #tpu.memory_space<vmem>>, %arg4: memref<1x96xf32, #tpu.memory_space<vmem>>, %arg5: memref<1x8x96xbf16, #tpu.memory_space<vmem>>) attributes {dimension_semantics = [#tpu.dimension_semantics<parallel>, #tpu.dimension_semantics<parallel>], iteration_bounds = array<i64: 2, 1>, scalar_prefetch = 0 : i64, scratch_operands = 0 : i64, tpu.core_type = #tpu.core_type<tc>, window_params = [{transform_indices = @transform_0, window_bounds = array<i64: 1, 8, 32>}, {pipeline_mode = #tpu.pipeline_mode<synchronous>, transform_indices = @transform_1, window_bounds = array<i64: 32, 96>}, {pipeline_mode = #tpu.pipeline_mode<synchronous>, transform_indices = @transform_2, window_bounds = array<i64: 1, 96>}, {transform_indices = @transform_3, window_bounds = array<i64: 1, 8, 96>}]} {
    %c0 = arith.constant 0 : index
    %c0_0 = arith.constant 0 : index
    %c0_1 = arith.constant 0 : index
    %0 = vector.load %arg2[%c0, %c0_0, %c0_1] : memref<1x8x32xbf16, #tpu.memory_space<vmem>>, vector<1x8x32xbf16>
    %1 = vector.shape_cast %0 : vector<1x8x32xbf16> to vector<8x32xbf16>
    %c0_2 = arith.constant 0 : index
    %c0_3 = arith.constant 0 : index
    %2 = vector.load %arg3[%c0_2, %c0_3] : memref<32x96xbf16, #tpu.memory_space<vmem>>, vector<32x96xbf16>
    %cst = arith.constant dense<0.000000e+00> : vector<8x96xf32>
    %3 = tpu.matmul %1, %2, %cst {dimension_numbers = #tpu.dot_dimension_numbers<[1], [0], [0], [1], [0, 0, 1, 1], [], []>} : vector<8x32xbf16>, vector<32x96xbf16>, vector<8x96xf32> -> vector<8x96xf32>
    %c0_4 = arith.constant 0 : index
    %c0_5 = arith.constant 0 : index
    %4 = vector.load %arg4[%c0_4, %c0_5] : memref<1x96xf32, #tpu.memory_space<vmem>>, vector<1x96xf32>
    %5 = vector.broadcast %4 : vector<1x96xf32> to vector<8x96xf32>
    %6 = arith.addf %3, %5 : vector<8x96xf32>
    %7 = arith.truncf %6 : vector<8x96xf32> to vector<8x96xbf16>
    %c0_6 = arith.constant 0 : index
    %c0_7 = arith.constant 0 : index
    %c0_8 = arith.constant 0 : index
    %8 = vector.load %arg5[%c0_6, %c0_7, %c0_8] : memref<1x8x96xbf16, #tpu.memory_space<vmem>>, vector<1x8x96xbf16>
    %9 = vector.shape_cast %8 : vector<1x8x96xbf16> to vector<8x96xbf16>
    %10 = vector.shape_cast %7 : vector<8x96xbf16> to vector<1x8x96xbf16>
    tpu.vector_store %arg5[%c0_6, %c0_7, %c0_8], %10 {strides = array<i32>} : memref<1x8x96xbf16, #tpu.memory_space<vmem>>, vector<1x8x96xbf16>,
    return
  }
  func.func @transform_0(%arg0: i32, %arg1: i32) -> (i32, i32, i32) {
    %c0_i32 = arith.constant 0 : i32
    %c0_i32_0 = arith.constant 0 : i32
    return %arg0, %arg1, %c0_i32 : i32, i32, i32
  }
  func.func @transform_1(%arg0: i32, %arg1: i32) -> (i32, i32) {
    %c0_i32 = arith.constant 0 : i32
    %c0_i32_0 = arith.constant 0 : i32
    %c0_i32_1 = arith.constant 0 : i32
    return %c0_i32, %c0_i32_0 : i32, i32
  }
  func.func @transform_2(%arg0: i32, %arg1: i32) -> (i32, i32) {
    %c0_i32 = arith.constant 0 : i32
    %c0_i32_0 = arith.constant 0 : i32
    %c0_i32_1 = arith.constant 0 : i32
    return %c0_i32, %c0_i32_0 : i32, i32
  }
  func.func @transform_3(%arg0: i32, %arg1: i32) -> (i32, i32, i32) {
    %c0_i32 = arith.constant 0 : i32
    %c0_i32_0 = arith.constant 0 : i32
    return %arg0, %arg1, %c0_i32 : i32, i32, i32
  }
}

</mosaic_0001>

<llo_original>
// kernel: tpu_custom_call.1
$region0: #{tpu_custom_call.1}
  #allocation0 [shape = 'u32[]', space=smem, size = 0x4, offset = 0x4, fixed_abs, tag = 'smem constant byte address 0x4 - core index']
  #allocation1 [shape = 'u32[144,128]{1,0:T(1,128)}', space=vmem, size = 0x12000, scoped, tag = 'internal scratch']
  %s0 = inlined_call_operand.hbm [shape: bf16[2,8,32], index: 0, kind: input, shape index: {}]
  %s1 = inlined_call_operand.hbm [shape: bf16[32,96], index: 1, kind: input, shape index: {}]
  %s2 = inlined_call_operand.vmem [shape: f32[1,96], index: 2, kind: input, shape index: {}]
  %s3 = inlined_call_operand.hbm [shape: bf16[2,8,96], index: 3, kind: output, shape index: {}]
  %s4 = sld [smem:[#allocation0]]
  $region53: #{tpu_custom_call.1} parent=0
    _
  %s6 = ssub.s32 1, %s4
  %s7 = scalar_select 0, %s6, %s4
  $region1: #{tpu_custom_call.1} parent=0
    #allocation2 [shape = 'u8[4096]{0}', space=vmem, size = 0x1000, scoped, tag = 'input window, operand 0']
    #allocation3 [shape = 's32[2]{0}', space=sflag, size = 0x8, scoped, tag = 'scoped memory for tpu_custom_call.1']
    #allocation4 [shape = 's32[2]{0}', space=sflag, size = 0x8, scoped, tag = 'scoped memory for tpu_custom_call.1']
    #allocation5 [shape = 'u8[8192]{0}', space=vmem, size = 0x2000, scoped, tag = 'input window, operand 1, single buffered']
    #allocation6 [shape = 's32[1]{0}', space=sflag, size = 0x4, scoped, tag = 'scoped memory for tpu_custom_call.1']
    #allocation7 [shape = 'u8[4096]{0}', space=vmem, size = 0x1000, scoped, tag = 'output window, operand 0']
    %8 = vsyncpa [#allocation3], 0
    %s9 = scalar_lea.sflag [#allocation3], 1
    %10 = vsyncpa %s9, 0
    %11 = vsyncpa [#allocation6], 0
    %12 = vsyncpa [#allocation4], 0
    %s13 = scalar_lea.sflag [#allocation4], 1
    %14 = vsyncpa %s13, 0
    loop: start=0, step=1, limit=4
    $region2: #{tpu_custom_call.1} parent=1 // loop_pre_header
      _
    $region3: #{tpu_custom_call.1} parent=1 // loop_header
      %s16 = sphi 0, %s20
      %p17 = scmp.ge.s32.totalorder %s16, 4
      %s23 = sphi 0, %s35
      %s24 = sphi 0, %s31
      %s25 = sphi 0, %s23
      %s26 = sphi 0, %s24
      %s27 = sphi 0, %s25
      %s28 = sphi 0, %s26
      %s40 = sphi 0, %s42
      %s43 = sphi 0, %s40
      %s44 = sphi 0, %s43
      %s60 = sphi 0, %s44
      %s64 = sphi 0, %s64
      %s66 = sphi 0, %s64
      %s67 = sphi 0, %s66
      %s81 = sphi 0, %s67
      %s85 = sphi 0, %s85
      %s87 = sphi 0, %s85
      %s88 = sphi 0, %s87
      %s102 = sphi 0, %s88
      %s110 = sphi 0, %s112
      %s113 = sphi 0, %s110
      %s114 = sphi 0, %s113
      %s130 = sphi 0, %s114
    $region4: #{tpu_custom_call.1} parent=1 // loop_header_branch
      %19 = sbr.rel (%p17) target = $region8
    $region5: #{tpu_custom_call.1} parent=1 // loop_body
      %s21 = ssub.s32 %s16, 1
      %s22 = ssub.s32 %s16, 2
      %s29 = sadd.s32 1, %s24
      %p30 = scmp.ge.s32.totalorder %s29, 1
      %s31 = scalar_select %p30, 0, %s29
      %s32 = sadd.s32 1, %s23
      %s33 = scalar_select %p30, %s32, %s23
      %p34 = scmp.ge.s32.totalorder %s33, 2
      %s35 = scalar_select %p34, 0, %s33
      %s36 = ssub.s32 %s23, %s35
      %s37 = ssub.s32 %s24, %s31
      %s38 = sor.u32 %s36, %s37
      %p39 = scmp.eq.s32.totalorder %s38, 0
      %s41 = sadd.s32 %s40, 1
      %s42 = scalar_select %p39, %s40, %s41
      %p45 = pneg %p39
      %p46 = scmp.eq.s32.totalorder %s16, 1
      %p47 = por %p45, %p46
      %p48 = scmp.ne.s32.totalorder %s40, %s43
      %p49 = scmp.eq.s32.totalorder %s16, 0
      %p50 = por %p48, %p49
      %p51 = scmp.ne.s32.totalorder %s40, %s43
      %p52 = scmp.eq.s32.totalorder %s21, 1
      %p53 = por %p51, %p52
      %p54 = scmp.ne.s32.totalorder %s43, %s44
      %p55 = scmp.eq.s32.totalorder %s21, 0
      %p56 = por %p54, %p55
      %p57 = scmp.ne.s32.totalorder %s43, %s44
      %p58 = scmp.eq.s32.totalorder %s22, 1
      %p59 = por %p57, %p58
      %p61 = scmp.ne.s32.totalorder %s44, %s60
      %p62 = scmp.eq.s32.totalorder %s22, 0
      %p63 = por %p61, %p62
      %s65 = sadd.s32 %s64, 1
      %p68 = scmp.eq.s32.totalorder %s16, 1
      %p69 = scmp.ne.s32.totalorder %s64, %s66
      %p70 = scmp.eq.s32.totalorder %s16, 0
      %p71 = por %p69, %p70
      %p72 = scmp.ne.s32.totalorder %s64, %s66
      %p73 = scmp.eq.s32.totalorder %s21, 1
      %p74 = por %p72, %p73
      %p75 = scmp.ne.s32.totalorder %s66, %s67
      %p76 = scmp.eq.s32.totalorder %s21, 0
      %p77 = por %p75, %p76
      %p78 = scmp.ne.s32.totalorder %s66, %s67
      %p79 = scmp.eq.s32.totalorder %s22, 1
      %p80 = por %p78, %p79
      %p82 = scmp.ne.s32.totalorder %s67, %s81
      %p83 = scmp.eq.s32.totalorder %s22, 0
      %p84 = por %p82, %p83
      %s86 = sadd.s32 %s85, 1
      %p89 = scmp.eq.s32.totalorder %s16, 1
      %p90 = scmp.ne.s32.totalorder %s85, %s87
      %p91 = scmp.eq.s32.totalorder %s16, 0
      %p92 = por %p90, %p91
      %p93 = scmp.ne.s32.totalorder %s85, %s87
      %p94 = scmp.eq.s32.totalorder %s21, 1
      %p95 = por %p93, %p94
      %p96 = scmp.ne.s32.totalorder %s87, %s88
      %p97 = scmp.eq.s32.totalorder %s21, 0
      %p98 = por %p96, %p97
      %p99 = scmp.ne.s32.totalorder %s87, %s88
      %p100 = scmp.eq.s32.totalorder %s22, 1
      %p101 = por %p99, %p100
      %p103 = scmp.ne.s32.totalorder %s88, %s102
      %p104 = scmp.eq.s32.totalorder %s22, 0
      %p105 = por %p103, %p104
      %s106 = ssub.s32 %s23, %s35
      %s107 = ssub.s32 %s24, %s31
      %s108 = sor.u32 %s106, %s107
      %p109 = scmp.eq.s32.totalorder %s108, 0
      %s111 = sadd.s32 %s110, 1
      %s112 = scalar_select %p109, %s110, %s111
      %p115 = pneg %p109
      %p116 = scmp.eq.s32.totalorder %s16, 1
      %p117 = por %p115, %p116
      %p118 = scmp.ne.s32.totalorder %s110, %s113
      %p119 = scmp.eq.s32.totalorder %s16, 0
      %p120 = por %p118, %p119
      %p121 = scmp.ne.s32.totalorder %s110, %s113
      %p122 = scmp.eq.s32.totalorder %s21, 1
      %p123 = por %p121, %p122
      %p124 = scmp.ne.s32.totalorder %s113, %s114
      %p125 = scmp.eq.s32.totalorder %s21, 0
      %p126 = por %p124, %p125
      %p127 = scmp.ne.s32.totalorder %s113, %s114
      %p128 = scmp.eq.s32.totalorder %s22, 1
      %p129 = por %p127, %p128
      %p131 = scmp.ne.s32.totalorder %s114, %s130
      %p132 = scmp.eq.s32.totalorder %s22, 0
      %p133 = por %p131, %p132
      %p134 = scmp.le.s32.totalorder 1, %s16
      %p135 = scmp.lt.s32.totalorder %s16, 3
      %p136 = pnand %p134, %p135
      %p137 = pneg %p136
      // Predicated region
      $region9: #{tpu_custom_call.1} parent=5 // pred_check
        _
      $region10: #{tpu_custom_call.1} parent=5 // pred_check_branch
        %139 = sbr.rel (%p136) target = $region12
      $region11: #{tpu_custom_call.1} parent=5 // pred_region
        %s140 = ssub.s32 %s16, 1
        // Predicated region
        $region13: #{tpu_custom_call.1} parent=11 // pred_check
          %p141 = pneg %p77
        $region14: #{tpu_custom_call.1} parent=11 // pred_check_branch
          %143 = sbr.rel (%p141) target = $region16
        $region15: #{tpu_custom_call.1} parent=11 // pred_region
          %s145 = ssub.s32 256, 256
          %146 = vsyncadd [#allocation6], %s145
          %s147 = sshll.u32 [#allocation5], 4
          %s148 = int_to_ptr.vmem [resolvable:$true] %s147
          %153 = dma.hbm_to_vmem [thread:$0]  %s1, 256, %s148, [#allocation6], 64, 64, 4
        $region16: #{tpu_custom_call.1} parent=11 // pred_fallthru
          _
        // Predicated region
        $region17: #{tpu_custom_call.1} parent=11 // pred_check
          %p154 = pneg %p98
        $region18: #{tpu_custom_call.1} parent=11 // pred_check_branch
          %156 = sbr.rel (%p154) target = $region20
        $region19: #{tpu_custom_call.1} parent=11 // pred_region
          _
        $region20: #{tpu_custom_call.1} parent=11 // pred_fallthru
          _
      $region12: #{tpu_custom_call.1} parent=5 // pred_fallthru
        _
      %p157 = scmp.lt.s32.totalorder %s16, 2
      // Predicated region
      $region21: #{tpu_custom_call.1} parent=5 // pred_check
        %p158 = pneg %p157
      $region22: #{tpu_custom_call.1} parent=5 // pred_check_branch
        %160 = sbr.rel (%p158) target = $region24
      $region23: #{tpu_custom_call.1} parent=5 // pred_region
        // Predicated region
        $region25: #{tpu_custom_call.1} parent=23 // pred_check
          %p161 = pneg %p50
        $region26: #{tpu_custom_call.1} parent=23 // pred_check_branch
          %163 = sbr.rel (%p161) target = $region28
        $region27: #{tpu_custom_call.1} parent=23 // pred_region
          %s164 = sand.u32 %s40, 1
          %s165 = scalar_lea.sflag [#allocation3], %s164
          %s166 = sand.u32 %s40, 1
          %s167 = smul.addr %s166, 4
          %s168 = scalar_lea.vmem [#allocation2], %s167
          %s170 = ssub.s32 64, 64
          %171 = vsyncadd %s165, %s170
          %s172 = sadd.s32 %s24, %s23
          %s173 = smul.addr %s172, 64
          %s174 = scalar_lea.hbm %s0, %s173
          %s176 = sshll.u32 %s168, 4
          %s177 = int_to_ptr.vmem [resolvable:$true] %s176
          %179 = dma.hbm_to_vmem [thread:$0]  %s174, 64, %s177, %s165
        $region28: #{tpu_custom_call.1} parent=23 // pred_fallthru
          _
      $region24: #{tpu_custom_call.1} parent=5 // pred_fallthru
        _
      %p180 = scmp.le.s32.totalorder 1, %s16
      %p181 = scmp.lt.s32.totalorder %s16, 3
      %p182 = pnand %p180, %p181
      %p183 = pneg %p182
      // Predicated region
      $region29: #{tpu_custom_call.1} parent=5 // pred_check
        _
      $region30: #{tpu_custom_call.1} parent=5 // pred_check_branch
        %185 = sbr.rel (%p182) target = $region32
      $region31: #{tpu_custom_call.1} parent=5 // pred_region
        %s186 = ssub.s32 %s16, 1
        %s187 = sand.u32 %s43, 1
        %s188 = scalar_lea.sflag [#allocation3], %s187
        %s189 = sand.u32 %s43, 1
        %s190 = smul.addr %s189, 4
        %s191 = scalar_lea.vmem [#allocation2], %s190
        // Predicated region
        $region33: #{tpu_custom_call.1} parent=31 // pred_check
          %p192 = pneg %p56
        $region34: #{tpu_custom_call.1} parent=31 // pred_check_branch
          %194 = sbr.rel (%p192) target = $region36
        $region35: #{tpu_custom_call.1} parent=31 // pred_region
          %195 = dma.done %s188, 64
        $region36: #{tpu_custom_call.1} parent=31 // pred_fallthru
          _
        // Predicated region
        $region37: #{tpu_custom_call.1} parent=31 // pred_check
          %p196 = pneg %p77
        $region38: #{tpu_custom_call.1} parent=31 // pred_check_branch
          %198 = sbr.rel (%p196) target = $region40
        $region39: #{tpu_custom_call.1} parent=31 // pred_region
          %199 = dma.done [#allocation6], 256
        $region40: #{tpu_custom_call.1} parent=31 // pred_fallthru
          _
        %s200 = sand.u32 %s43, 1
        %s201 = scalar_lea.sflag [#allocation3], %s200
        %s202 = sand.u32 %s43, 1
        %s203 = smul.addr %s202, 4
        %s204 = scalar_lea.vmem [#allocation2], %s203
        %p205 = pneg %p56
        %p206 = pneg %p53
        %p207 = pneg %p77
        %p208 = pneg %p74
        %p209 = pneg %p98
        %p210 = pneg %p95
        %p211 = pneg %p126
        %p212 = pneg %p123
        %s213 = sand.u32 %s113, 1
        %s214 = scalar_lea.sflag [#allocation4], %s213
        %s215 = sand.u32 %s113, 1
        %s216 = smul.addr %s215, 4
        %s217 = scalar_lea.vmem [#allocation7], %s216
        %v219 = vld [vmem:[%s191] sm:$0xf]
        %v220 = vld [vmem:[#allocation5] sm:$0xf]
        %v221 = vld [vmem:[#allocation5 + $0x4] sm:$0xf]
        %v222 = vld [vmem:[#allocation5 + $0x8] sm:$0xf]
        %v223 = vld [vmem:[#allocation5 + $0xc] sm:$0xf]
        %v224 = vld [vmem:[%s2] sm:$0x1]
        %v226 = vlaneseq
        %v227 = vshrl.u32 %v226, 7
        %v228 = vsub.s32 0, %v227
        %v229 = vrot.slane %v224, %v228
        %v235 = vunpack.c.l.b16 %v220
        %v236 = vunpack.c.l.b16 %v221
        %v237 = vunpack.c.l.b16 %v222
        %v238 = vunpack.c.l.b16 %v223
        %v239 = vpack.c.b16 %v236, %v235
        %v240 = vpack.c.b16 %v238, %v237
        %vm243 = vcmask 261120
        %v245 = vsel %vm243, %v219, 0
        %247 = vmatprep.subr.bf16.mxu0 0
        %248 = vmatpush1.bf16.msra.mxu0 %v239
        %249 = vmatprep.subr.bf16.mxu0 0
        %250 = vmatpush1.bf16.msra.mxu0 %v240
        %251 = vmatprep.subr.bf16.mxu0 0
        %252 = vmatpush1.bf16.msra.mxu0 0
        %253 = vmatprep.subr.bf16.mxu0 0
        %254 = vmatpush1.bf16.msra.mxu0 0
        %255 = vmatprep.subr.bf16.mxu0 0
        %256 = vmatpush1.bf16.msra.mxu0 0
        %257 = vmatprep.subr.bf16.mxu0 0
        %258 = vmatpush1.bf16.msra.mxu0 0
        %259 = vmatprep.subr.bf16.mxu0 0
        %260 = vmatpush1.bf16.msra.mxu0 0
        %261 = vmatprep.subr.bf16.mxu0 0
        %262 = vmatpush1.bf16.msra.mxu0 0
        %263 = vmatprep.subr.bf16.mxu0 0
        %264 = vmatpush1.bf16.msra.mxu0 0
        %265 = vmatprep.subr.bf16.mxu0 0
        %266 = vmatpush1.bf16.msra.mxu0 0
        %267 = vmatprep.subr.bf16.mxu0 0
        %268 = vmatpush1.bf16.msra.mxu0 0
        %269 = vmatprep.subr.bf16.mxu0 0
        %270 = vmatpush1.bf16.msra.mxu0 0
        %271 = vmatprep.subr.bf16.mxu0 0
        %272 = vmatpush1.bf16.msra.mxu0 0
        %273 = vmatprep.subr.bf16.mxu0 0
        %274 = vmatpush1.bf16.msra.mxu0 0
        %275 = vmatprep.subr.bf16.mxu0 0
        %276 = vmatpush1.bf16.msra.mxu0 0
        %277 = vmatprep.subr.bf16.mxu0 0
        %278 = vmatpush1.bf16.msra.mxu0 0
        %279 = vmatprep.mubr.bf16.mxu0 0
        %280 = vmatmul.mubr.bf16.gmra.mrb[0].mxu0 %v245
        %v281 = vpop.f32.mrb[0].mxu0
        %v282 = vadd.f32 %v229, %v281
        %v283 = vpop.f32.mrb[0].mxu0
        %v284 = vpop.f32.mrb[0].mxu0
        %v285 = vpop.f32.mrb[0].mxu0
        %286 = vdwg.mxu0
        %v287 = vpack.c.bf16 %v282, %v282
        %vm288 = vcmask 781312
        %289 = vst.msk [vmem:[%s217] sm:$0xf] %vm288, %v287
        %s290 = sand.u32 %s113, 1
        %s291 = scalar_lea.sflag [#allocation4], %s290
        %s292 = sand.u32 %s113, 1
        %s293 = smul.addr %s292, 4
        %s294 = scalar_lea.vmem [#allocation7], %s293
        // Predicated region
        $region41: #{tpu_custom_call.1} parent=31 // pred_check
          %p295 = pneg %p123
        $region42: #{tpu_custom_call.1} parent=31 // pred_check_branch
          %297 = sbr.rel (%p295) target = $region44
        $region43: #{tpu_custom_call.1} parent=31 // pred_region
          %s299 = ssub.s32 64, 64
          %300 = vsyncadd %s291, %s299
          %s301 = sadd.s32 %s26, %s25
          %s302 = smul.addr %s301, 64
          %s303 = scalar_lea.hbm %s3, %s302
          %s305 = sshll.u32 %s294, 4
          %s306 = int_to_ptr.vmem [resolvable:$true] %s305
          %308 = dma.vmem_to_hbm [thread:$0]  %s306, 64, %s303, %s291
        $region44: #{tpu_custom_call.1} parent=31 // pred_fallthru
          _
      $region32: #{tpu_custom_call.1} parent=5 // pred_fallthru
        _
      %p309 = scmp.le.s32.totalorder 2, %s16
      // Predicated region
      $region45: #{tpu_custom_call.1} parent=5 // pred_check
        %p310 = pneg %p309
      $region46: #{tpu_custom_call.1} parent=5 // pred_check_branch
        %312 = sbr.rel (%p310) target = $region48
      $region47: #{tpu_custom_call.1} parent=5 // pred_region
        %s313 = ssub.s32 %s16, 2
        // Predicated region
        $region49: #{tpu_custom_call.1} parent=47 // pred_check
          %p314 = pneg %p129
        $region50: #{tpu_custom_call.1} parent=47 // pred_check_branch
          %316 = sbr.rel (%p314) target = $region52
        $region51: #{tpu_custom_call.1} parent=47 // pred_region
          %s317 = sand.u32 %s114, 1
          %s318 = scalar_lea.sflag [#allocation4], %s317
          %s319 = sand.u32 %s114, 1
          %s320 = smul.addr %s319, 4
          %s321 = scalar_lea.vmem [#allocation7], %s320
          %322 = dma.done %s318, 64
        $region52: #{tpu_custom_call.1} parent=47 // pred_fallthru
          _
      $region48: #{tpu_custom_call.1} parent=5 // pred_fallthru
        _
    $region6: #{tpu_custom_call.1} parent=1 // loop_footer
      %s20 = sadd.s32 1, %s16
    $region7: #{tpu_custom_call.1} parent=1 // loop_footer_branch
      %15 = sbr.rel target = $region3
    $region8: #{tpu_custom_call.1} parent=1 // loop_exit
      _
    %323 = vsyncpa [#allocation3], 1
    %s324 = scalar_lea.sflag [#allocation3], 1
    %325 = vsyncpa %s324, 1
    %326 = vsyncpa [#allocation6], 1
    %327 = vsyncpa [#allocation4], 1
    %s328 = scalar_lea.sflag [#allocation4], 1
    %329 = vsyncpa %s328, 1

</llo_original>
